<compile_context>
chip_gen: v7x
topology: tpu7x:2x2x1
jax: 0.10.0
libtpu: 0.0.40
codegen_flags: <defaults>
</compile_context>

<pallas_src>
import functools

import jax
import jax.numpy as jnp
from jax.experimental import pallas as pl
from jax.experimental.pallas import tpu as pltpu

_LANE = 128
_SUBLANE = 8


def _round_up(x, m):
    return ((x + m - 1) // m) * m


def _cdiv(a, b):
    return -(-a // b)


def _vmem_capacity_bytes():
    """Physical VMEM of the local TPU generation (conservative fallback)."""
    try:
        return int(pltpu.get_tpu_info().vmem_capacity_bytes)
    except Exception:
        pass
    try:
        kind = jax.devices()[0].device_kind.lower()
        if "v5" in kind or "v6" in kind:
            return 128 * 1024 * 1024
    except Exception:
        pass
    return 64 * 1024 * 1024            # v7x-sized default (safe everywhere)


def _budgets():
    """(x-tile byte budget, vmem_limit cap) for the current generation."""
    cap = _vmem_capacity_bytes()
    if cap >= 96 * 1024 * 1024:                       # v5e / v6e: 128 MiB VMEM
        return 96 * 1024 * 1024, 110 * 1024 * 1024
    return 40 * 1024 * 1024, 56 * 1024 * 1024         # v7x: 64 MiB VMEM


def _vmem_limit(tile_bytes, cap):
    need = tile_bytes + 2 * 1024 * 1024               # temps / compiler headroom
    return int(min(max(need, 16 * 1024 * 1024), cap))


# ---------------------------------------------------------------------------
# Fused path: pool + MLP + scale in one kernel, bt images per grid step.
# ---------------------------------------------------------------------------
def _fused_kernel(x_ref, w1_ref, b1_ref, w2_ref, b2_ref, o_ref, *, inv_hw):
    # Global average pool: f32 accumulation over the true HW columns.
    pooled = jnp.sum(x_ref[...], axis=-1, dtype=jnp.float32) * inv_hw   # (bt, C)
    # Linear -> ReLU -> Linear -> Sigmoid (M = bt).
    h = jnp.dot(pooled, w1_ref[...], preferred_element_type=jnp.float32) + b1_ref[...]
    h = jnp.maximum(h, 0.0)
    a = jnp.dot(h, w2_ref[...], preferred_element_type=jnp.float32) + b2_ref[...]
    att = jax.nn.sigmoid(a).astype(o_ref.dtype)                         # (bt, C)
    # Second (separate) read of the input buffer keeps the big slab streaming
    # instead of a long-lived vector value; multiply in the native dtype.
    o_ref[...] = (x_ref[...] * att[:, :, None]).astype(o_ref.dtype)


# ---------------------------------------------------------------------------
# Two-pass fallback, pass 1: pooled sums, accumulated straight into the
# VMEM-resident output block (no scratch); tail spatial tile masked in-kernel.
# ---------------------------------------------------------------------------
def _pool_kernel(x_ref, pooled_ref, *, hw, tile, nt_per, need_mask):
    t = pl.program_id(2)

    @pl.when(t == 0)
    def _():
        pooled_ref[...] = jnp.zeros_like(pooled_ref)

    x = x_ref[...]                                           # (1, C, tile)
    if need_mask:
        start = (pl.program_id(0) * nt_per + t) * tile
        col = jax.lax.broadcasted_iota(jnp.int32, x.shape, 2) + start
        x = jnp.where(col < hw, x, 0)
    psum = jnp.sum(x, axis=-1, dtype=jnp.float32)            # (1, C)
    pooled_ref[...] += psum.reshape(pooled_ref.shape)


# Pass 2: per-channel scale, tiled over HW (both grid axes parallel).
def _scale_kernel(x_ref, att_ref, o_ref):
    att = att_ref[0]                                         # (1, C), native dtype
    o_ref[...] = (x_ref[...] * att[:, :, None]).astype(o_ref.dtype)


def channel_attention(x_nchw, w1, b1, w2, b2, *,
                      force_two_pass=False, spatial_tile=None):
    """x_nchw: (B, C, H, W); w1: (C, Ch); b1: (Ch,); w2: (Ch, C); b2: (C,)."""
    B, C, H, W = x_nchw.shape
    Ch = w1.shape[1]
    HW = H * W
    dtype = x_nchw.dtype
    itemsize = x_nchw.dtype.itemsize
    inv_hw = 1.0 / float(HW)

    x_flat = x_nchw.reshape(B, C, HW)
    w1f = w1.astype(jnp.float32)
    w2f = w2.astype(jnp.float32)
    b1_2d = b1.astype(jnp.float32).reshape(1, Ch)
    b2_2d = b2.astype(jnp.float32).reshape(1, C)

    x_budget, limit_cap = _budgets()

    # VMEM footprint of one image's (C, HW) slab after Mosaic layout padding.
    slab_vmem = _round_up(C, _SUBLANE) * _round_up(HW, _LANE) * itemsize
    # Weights / biases live in VMEM too (double-buffered by the pipeline).
    weights_vmem = 2 * 4 * (2 * C * Ch + C + Ch)
    x_budget_eff = x_budget - weights_vmem

    fits_fused = (x_budget_eff > 0 and 4 * slab_vmem <= x_budget_eff
                  and not force_two_pass)

    if fits_fused:
        # ---------------- fused single pass: 1 HBM read + 1 write ----------
        bt = min(B, max(1, x_budget_eff // (4 * slab_vmem)))
        if B >= 2:
            # >= 2 grid steps so both v7x TensorCores get work; on single-TC
            # v5e/v6e this only adds one ~0.35 us grid step.
            bt = min(bt, _cdiv(B, 2))
        nb = _cdiv(B, bt)

        out = pl.pallas_call(
            functools.partial(_fused_kernel, inv_hw=inv_hw),
            out_shape=jax.ShapeDtypeStruct((B, C, HW), dtype),
            grid_spec=pltpu.PrefetchScalarGridSpec(
                num_scalar_prefetch=0,
                grid=(nb,),
                in_specs=[
                    pl.BlockSpec((bt, C, HW), lambda b: (b, 0, 0)),   # x slab
                    pl.BlockSpec((C, Ch), lambda b: (0, 0)),          # w1
                    pl.BlockSpec((1, Ch), lambda b: (0, 0)),          # b1
                    pl.BlockSpec((Ch, C), lambda b: (0, 0)),          # w2
                    pl.BlockSpec((1, C), lambda b: (0, 0)),           # b2
                ],
                out_specs=pl.BlockSpec((bt, C, HW), lambda b: (b, 0, 0)),
            ),
            compiler_params=pltpu.CompilerParams(
                dimension_semantics=("parallel",),
                vmem_limit_bytes=_vmem_limit(
                    4 * bt * slab_vmem + weights_vmem, limit_cap),
            ),
        )(x_flat, w1f, b1_2d, w2f, b2_2d)
        return out.reshape(B, C, H, W)

    # ------------------------- two-pass fallback ---------------------------
    c_pad = _round_up(C, _SUBLANE)

    def _pick_tile(n_buffers):
        if spatial_tile is not None:
            t = _round_up(int(spatial_tile), _LANE)
        else:
            t = x_budget // (n_buffers * c_pad * itemsize)
            t = max(_LANE, (t // _LANE) * _LANE)
        if t >= HW:
            t = HW                       # single full-extent tile, no mask
        return t

    # ---- pass 1: pooled sums (input-only double buffering -> bigger T1) ----
    T1 = _pick_tile(2)
    nt1 = _cdiv(HW, T1)
    need_mask1 = (HW % T1) != 0
    # Tiny-batch v7x load balance: split the spatial axis across a leading
    # parallel grid axis (exact even split only, so block indices stay valid).
    n_split = 2 if (B <= 2 and nt1 >= 2 and nt1 % 2 == 0) else 1
    nt_per = nt1 // n_split

    partials = pl.pallas_call(
        functools.partial(_pool_kernel, hw=HW, tile=T1, nt_per=nt_per,
                          need_mask=need_mask1),
        out_shape=jax.ShapeDtypeStruct((n_split, B, 1, C), jnp.float32),
        grid_spec=pltpu.PrefetchScalarGridSpec(
            num_scalar_prefetch=0,
            grid=(n_split, B, nt_per),
            in_specs=[pl.BlockSpec(
                (1, C, T1), lambda s, b, t, n=nt_per: (b, 0, s * n + t))],
            out_specs=pl.BlockSpec((1, 1, 1, C), lambda s, b, t: (s, b, 0, 0)),
        ),
        compiler_params=pltpu.CompilerParams(
            dimension_semantics=("parallel", "parallel", "arbitrary"),
            vmem_limit_bytes=_vmem_limit(2 * c_pad * T1 * itemsize, limit_cap),
        ),
    )(x_flat)

    # Tiny 2-layer MLP as one batched matmul in plain XLA (keeps MXU latency
    # off the per-tile critical path of the scale pass).
    pooled = partials.sum(axis=0)[:, 0, :] * inv_hw            # (B, C) f32
    h = jnp.maximum(pooled @ w1f + b1_2d, 0.0)
    att = jax.nn.sigmoid(h @ w2f + b2_2d).astype(dtype).reshape(B, 1, C)

    # ---- pass 2: per-channel scale, tiled over HW, both axes parallel -----
    T2 = _pick_tile(4)
    nt2 = _cdiv(HW, T2)

    out = pl.pallas_call(
        _scale_kernel,
        out_shape=jax.ShapeDtypeStruct((B, C, HW), dtype),
        grid_spec=pltpu.PrefetchScalarGridSpec(
            num_scalar_prefetch=0,
            grid=(B, nt2),
            in_specs=[
                pl.BlockSpec((1, C, T2), lambda b, t: (b, 0, t)),
                pl.BlockSpec((1, 1, C), lambda b, t: (b, 0, 0)),
            ],
            out_specs=pl.BlockSpec((1, C, T2), lambda b, t: (b, 0, t)),
        ),
        compiler_params=pltpu.CompilerParams(
            dimension_semantics=("parallel", "parallel"),
            vmem_limit_bytes=_vmem_limit(4 * c_pad * T2 * itemsize, limit_cap),
        ),
    )(x_flat, att)
    return out.reshape(B, C, H, W)


def _reference(x_nchw, w1, b1, w2, b2):
    pooled = jnp.mean(x_nchw, axis=(2, 3))
    h = jnp.maximum(pooled @ w1 + b1, 0.0)
    att = jax.nn.sigmoid(h @ w2 + b2)
    return x_nchw * att[:, :, None, None]


if __name__ == "__main__":
    key = jax.random.PRNGKey(0)
    kx, k1, k2, k3, k4 = jax.random.split(key, 5)

    B, C, H, W = 2, 8, 16, 16
    ratio = 4
    Ch = C // ratio

    # Deterministic parameter init (PyTorch Linear-style uniform bounds).
    bound1 = 1.0 / (C ** 0.5)
    bound2 = 1.0 / (Ch ** 0.5)
    w1 = jax.random.uniform(k1, (C, Ch), jnp.float32, -bound1, bound1)
    b1 = jax.random.uniform(k2, (Ch,), jnp.float32, -bound1, bound1)
    w2 = jax.random.uniform(k3, (Ch, C), jnp.float32, -bound2, bound2)
    b2 = jax.random.uniform(k4, (C,), jnp.float32, -bound2, bound2)

    x = jax.random.normal(kx, (B, C, H, W), dtype=jnp.float32)
    ref = _reference(x, w1, b1, w2, b2)

    # 1) fused single-pass path (lane-aligned HW).
    out = jax.block_until_ready(channel_attention(x, w1, b1, w2, b2))
    assert out.shape == (B, C, H, W)
    assert jnp.allclose(out, ref, atol=1e-5, rtol=1e-5)

    # 2) two-pass fallback (forced), exercising the split-parallel pool pass.
    out2 = jax.block_until_ready(
        channel_attention(x, w1, b1, w2, b2, force_two_pass=True, spatial_tile=128))
    assert out2.shape == (B, C, H, W)
    assert jnp.allclose(out2, ref, atol=1e-5, rtol=1e-5)

    # 3) fused path with non-128-multiple HW and a partial tail batch block.
    x3 = jax.random.normal(kx, (3, C, 10, 10), dtype=jnp.float32)
    ref3 = _reference(x3, w1, b1, w2, b2)
    out3 = jax.block_until_ready(channel_attention(x3, w1, b1, w2, b2))
    assert jnp.allclose(out3, ref3, atol=1e-5, rtol=1e-5)

    # 4) two-pass fallback with a masked spatial tail tile (HW=144, T=128).
    x4 = jax.random.normal(kx, (1, C, 12, 12), dtype=jnp.float32)
    ref4 = _reference(x4, w1, b1, w2, b2)
    out4 = jax.block_until_ready(
        channel_attention(x4, w1, b1, w2, b2, force_two_pass=True, spatial_tile=128))
    assert jnp.allclose(out4, ref4, atol=1e-5, rtol=1e-5)

    print("KERNEL_OK")
</pallas_src>

<mosaic_0001>
module attributes {stable_mosaic.version = 11 : i64} {
  func.func @_fused_kernel(%arg0: i32, %arg1: memref<1x8x256xf32, #tpu.memory_space<vmem>>, %arg2: memref<8x2xf32, #tpu.memory_space<vmem>>, %arg3: memref<1x2xf32, #tpu.memory_space<vmem>>, %arg4: memref<2x8xf32, #tpu.memory_space<vmem>>, %arg5: memref<1x8xf32, #tpu.memory_space<vmem>>, %arg6: memref<1x8x256xf32, #tpu.memory_space<vmem>>) attributes {dimension_semantics = [#tpu.dimension_semantics<parallel>], iteration_bounds = array<i64: 2>, scalar_prefetch = 0 : i64, scratch_operands = 0 : i64, tpu.core_type = #tpu.core_type<tc>, window_params = [{transform_indices = @transform_0, window_bounds = array<i64: 1, 8, 256>}, {pipeline_mode = #tpu.pipeline_mode<synchronous>, transform_indices = @transform_1, window_bounds = array<i64: 8, 2>}, {pipeline_mode = #tpu.pipeline_mode<synchronous>, transform_indices = @transform_2, window_bounds = array<i64: 1, 2>}, {pipeline_mode = #tpu.pipeline_mode<synchronous>, transform_indices = @transform_3, window_bounds = array<i64: 2, 8>}, {pipeline_mode = #tpu.pipeline_mode<synchronous>, transform_indices = @transform_4, window_bounds = array<i64: 1, 8>}, {transform_indices = @transform_5, window_bounds = array<i64: 1, 8, 256>}]} {
    %c0 = arith.constant 0 : index
    %c0_0 = arith.constant 0 : index
    %c0_1 = arith.constant 0 : index
    %0 = vector.load %arg1[%c0, %c0_0, %c0_1] : memref<1x8x256xf32, #tpu.memory_space<vmem>>, vector<1x8x256xf32>
    %cst = arith.constant dense<0.000000e+00> : vector<1x8xf32>
    %1 = vector.multi_reduction <add>, %0, %cst [2] : vector<1x8x256xf32> to vector<1x8xf32>
    %cst_2 = arith.constant 3.906250e-03 : f32
    %2 = vector.broadcast %cst_2 : f32 to vector<1x8xf32>
    %3 = arith.mulf %1, %2 : vector<1x8xf32>
    %c0_3 = arith.constant 0 : index
    %c0_4 = arith.constant 0 : index
    %4 = vector.load %arg2[%c0_3, %c0_4] : memref<8x2xf32, #tpu.memory_space<vmem>>, vector<8x2xf32>
    %cst_5 = arith.constant dense<0.000000e+00> : vector<1x2xf32>
    %5 = tpu.matmul %3, %4, %cst_5 {dimension_numbers = #tpu.dot_dimension_numbers<[1], [0], [0], [1], [0, 0, 1, 1], [], []>} : vector<1x8xf32>, vector<8x2xf32>, vector<1x2xf32> -> vector<1x2xf32>
    %c0_6 = arith.constant 0 : index
    %c0_7 = arith.constant 0 : index
    %6 = vector.load %arg3[%c0_6, %c0_7] : memref<1x2xf32, #tpu.memory_space<vmem>>, vector<1x2xf32>
    %7 = arith.addf %5, %6 : vector<1x2xf32>
    %cst_8 = arith.constant 0.000000e+00 : f32
    %8 = vector.broadcast %cst_8 : f32 to vector<1x2xf32>
    %9 = arith.maximumf %7, %8 : vector<1x2xf32>
    %c0_9 = arith.constant 0 : index
    %c0_10 = arith.constant 0 : index
    %10 = vector.load %arg4[%c0_9, %c0_10] : memref<2x8xf32, #tpu.memory_space<vmem>>, vector<2x8xf32>
    %cst_11 = arith.constant dense<0.000000e+00> : vector<1x8xf32>
    %11 = tpu.matmul %9, %10, %cst_11 {dimension_numbers = #tpu.dot_dimension_numbers<[1], [0], [0], [1], [0, 0, 1, 1], [], []>} : vector<1x2xf32>, vector<2x8xf32>, vector<1x8xf32> -> vector<1x8xf32>
    %c0_12 = arith.constant 0 : index
    %c0_13 = arith.constant 0 : index
    %12 = vector.load %arg5[%c0_12, %c0_13] : memref<1x8xf32, #tpu.memory_space<vmem>>, vector<1x8xf32>
    %13 = arith.addf %11, %12 : vector<1x8xf32>
    %14 = arith.negf %13 : vector<1x8xf32>
    %15 = math.exp %14 : vector<1x8xf32>
    %cst_14 = arith.constant 1.000000e+00 : f32
    %16 = vector.broadcast %cst_14 : f32 to vector<1x8xf32>
    %17 = arith.addf %16, %15 : vector<1x8xf32>
    %18 = arith.divf %16, %17 : vector<1x8xf32>
    %c0_15 = arith.constant 0 : index
    %c0_16 = arith.constant 0 : index
    %c0_17 = arith.constant 0 : index
    %19 = vector.load %arg1[%c0_15, %c0_16, %c0_17] : memref<1x8x256xf32, #tpu.memory_space<vmem>>, vector<1x8x256xf32>
    %20 = vector.shape_cast %18 : vector<1x8xf32> to vector<1x8x1xf32>
    %21 = vector.broadcast %20 : vector<1x8x1xf32> to vector<1x8x256xf32>
    %22 = arith.mulf %19, %21 : vector<1x8x256xf32>
    %c0_18 = arith.constant 0 : index
    %c0_19 = arith.constant 0 : index
    %c0_20 = arith.constant 0 : index
    %23 = vector.load %arg6[%c0_18, %c0_19, %c0_20] : memref<1x8x256xf32, #tpu.memory_space<vmem>>, vector<1x8x256xf32>
    tpu.vector_store %arg6[%c0_18, %c0_19, %c0_20], %22 {strides = array<i32>} : memref<1x8x256xf32, #tpu.memory_space<vmem>>, vector<1x8x256xf32>,
    return
  }
  func.func @transform_0(%arg0: i32) -> (i32, i32, i32) {
    %c0_i32 = arith.constant 0 : i32
    %c0_i32_0 = arith.constant 0 : i32
    %c0_i32_1 = arith.constant 0 : i32
    return %arg0, %c0_i32, %c0_i32_0 : i32, i32, i32
  }
  func.func @transform_1(%arg0: i32) -> (i32, i32) {
    %c0_i32 = arith.constant 0 : i32
    %c0_i32_0 = arith.constant 0 : i32
    %c0_i32_1 = arith.constant 0 : i32
    return %c0_i32, %c0_i32_0 : i32, i32
  }
  func.func @transform_2(%arg0: i32) -> (i32, i32) {
    %c0_i32 = arith.constant 0 : i32
    %c0_i32_0 = arith.constant 0 : i32
    %c0_i32_1 = arith.constant 0 : i32
    return %c0_i32, %c0_i32_0 : i32, i32
  }
  func.func @transform_3(%arg0: i32) -> (i32, i32) {
    %c0_i32 = arith.constant 0 : i32
    %c0_i32_0 = arith.constant 0 : i32
    %c0_i32_1 = arith.constant 0 : i32
    return %c0_i32, %c0_i32_0 : i32, i32
  }
  func.func @transform_4(%arg0: i32) -> (i32, i32) {
    %c0_i32 = arith.constant 0 : i32
    %c0_i32_0 = arith.constant 0 : i32
    %c0_i32_1 = arith.constant 0 : i32
    return %c0_i32, %c0_i32_0 : i32, i32
  }
  func.func @transform_5(%arg0: i32) -> (i32, i32, i32) {
    %c0_i32 = arith.constant 0 : i32
    %c0_i32_0 = arith.constant 0 : i32
    %c0_i32_1 = arith.constant 0 : i32
    return %arg0, %c0_i32, %c0_i32_0 : i32, i32, i32
  }
}

</mosaic_0001>

<llo_original>
// kernel: tpu_custom_call.1
$region0: #{tpu_custom_call.1}
  #allocation0 [shape = 'u32[]', space=smem, size = 0x4, offset = 0x4, fixed_abs, tag = 'smem constant byte address 0x4 - core index']
  #allocation1 [shape = 'u32[144,128]{1,0:T(1,128)}', space=vmem, size = 0x12000, scoped, tag = 'internal scratch']
  %s0 = inlined_call_operand.hbm [shape: f32[2,8,256], index: 0, kind: input, shape index: {}]
  %s1 = inlined_call_operand.vmem [shape: f32[8,2], index: 1, kind: input, shape index: {}]
  %s2 = inlined_call_operand.vmem [shape: f32[1,2], index: 2, kind: input, shape index: {}]
  %s3 = inlined_call_operand.vmem [shape: f32[2,8], index: 3, kind: input, shape index: {}]
  %s4 = inlined_call_operand.vmem [shape: f32[1,8], index: 4, kind: input, shape index: {}]
  %s5 = inlined_call_operand.hbm [shape: f32[2,8,256], index: 5, kind: output, shape index: {}]
  %s6 = sld [smem:[#allocation0]]
  $region57: #{tpu_custom_call.1} parent=0
    _
  %s8 = ssub.s32 1, %s6
  %s9 = scalar_select 0, %s8, %s6
  $region1: #{tpu_custom_call.1} parent=0
    #allocation2 [shape = 'u8[16384]{0}', space=vmem, size = 0x4000, scoped, tag = 'input window, operand 0']
    #allocation3 [shape = 's32[2]{0}', space=sflag, size = 0x8, scoped, tag = 'scoped memory for tpu_custom_call.1']
    #allocation4 [shape = 's32[2]{0}', space=sflag, size = 0x8, scoped, tag = 'scoped memory for tpu_custom_call.1']
    #allocation5 [shape = 'u8[16384]{0}', space=vmem, size = 0x4000, scoped, tag = 'output window, operand 0']
    %10 = vsyncpa [#allocation3], 0
    %s11 = scalar_lea.sflag [#allocation3], 1
    %12 = vsyncpa %s11, 0
    %13 = vsyncpa [#allocation4], 0
    %s14 = scalar_lea.sflag [#allocation4], 1
    %15 = vsyncpa %s14, 0
    loop: start=0, step=1, limit=4
    $region2: #{tpu_custom_call.1} parent=1 // loop_pre_header
      _
    $region3: #{tpu_custom_call.1} parent=1 // loop_header
      %s17 = sphi 0, %s21
      %p18 = scmp.ge.s32.totalorder %s17, 4
      %s27 = sphi 0, %s29
      %s30 = sphi 0, %s27
      %s31 = sphi 0, %s30
      %s47 = sphi 0, %s31
      %s51 = sphi 0, %s51
      %s53 = sphi 0, %s51
      %s54 = sphi 0, %s53
      %s68 = sphi 0, %s54
      %s72 = sphi 0, %s72
      %s74 = sphi 0, %s72
      %s75 = sphi 0, %s74
      %s89 = sphi 0, %s75
      %s93 = sphi 0, %s93
      %s95 = sphi 0, %s93
      %s96 = sphi 0, %s95
      %s110 = sphi 0, %s96
      %s114 = sphi 0, %s114
      %s116 = sphi 0, %s114
      %s117 = sphi 0, %s116
      %s131 = sphi 0, %s117
      %s137 = sphi 0, %s139
      %s140 = sphi 0, %s137
      %s141 = sphi 0, %s140
      %s157 = sphi 0, %s141
    $region4: #{tpu_custom_call.1} parent=1 // loop_header_branch
      %20 = sbr.rel (%p18) target = $region8
    $region5: #{tpu_custom_call.1} parent=1 // loop_body
      %s22 = ssub.s32 %s17, 1
      %s23 = ssub.s32 %s17, 2
      %s24 = sadd.s32 %s17, 1
      %s25 = ssub.s32 %s17, %s24
      %p26 = scmp.eq.s32.totalorder %s25, 0
      %s28 = sadd.s32 %s27, 1
      %s29 = scalar_select %p26, %s27, %s28
      %p32 = pneg %p26
      %p33 = scmp.eq.s32.totalorder %s17, 1
      %p34 = por %p32, %p33
      %p35 = scmp.ne.s32.totalorder %s27, %s30
      %p36 = scmp.eq.s32.totalorder %s17, 0
      %p37 = por %p35, %p36
      %p38 = scmp.ne.s32.totalorder %s27, %s30
      %p39 = scmp.eq.s32.totalorder %s22, 1
      %p40 = por %p38, %p39
      %p41 = scmp.ne.s32.totalorder %s30, %s31
      %p42 = scmp.eq.s32.totalorder %s22, 0
      %p43 = por %p41, %p42
      %p44 = scmp.ne.s32.totalorder %s30, %s31
      %p45 = scmp.eq.s32.totalorder %s23, 1
      %p46 = por %p44, %p45
      %p48 = scmp.ne.s32.totalorder %s31, %s47
      %p49 = scmp.eq.s32.totalorder %s23, 0
      %p50 = por %p48, %p49
      %s52 = sadd.s32 %s51, 1
      %p55 = scmp.eq.s32.totalorder %s17, 1
      %p56 = scmp.ne.s32.totalorder %s51, %s53
      %p57 = scmp.eq.s32.totalorder %s17, 0
      %p58 = por %p56, %p57
      %p59 = scmp.ne.s32.totalorder %s51, %s53
      %p60 = scmp.eq.s32.totalorder %s22, 1
      %p61 = por %p59, %p60
      %p62 = scmp.ne.s32.totalorder %s53, %s54
      %p63 = scmp.eq.s32.totalorder %s22, 0
      %p64 = por %p62, %p63
      %p65 = scmp.ne.s32.totalorder %s53, %s54
      %p66 = scmp.eq.s32.totalorder %s23, 1
      %p67 = por %p65, %p66
      %p69 = scmp.ne.s32.totalorder %s54, %s68
      %p70 = scmp.eq.s32.totalorder %s23, 0
      %p71 = por %p69, %p70
      %s73 = sadd.s32 %s72, 1
      %p76 = scmp.eq.s32.totalorder %s17, 1
      %p77 = scmp.ne.s32.totalorder %s72, %s74
      %p78 = scmp.eq.s32.totalorder %s17, 0
      %p79 = por %p77, %p78
      %p80 = scmp.ne.s32.totalorder %s72, %s74
      %p81 = scmp.eq.s32.totalorder %s22, 1
      %p82 = por %p80, %p81
      %p83 = scmp.ne.s32.totalorder %s74, %s75
      %p84 = scmp.eq.s32.totalorder %s22, 0
      %p85 = por %p83, %p84
      %p86 = scmp.ne.s32.totalorder %s74, %s75
      %p87 = scmp.eq.s32.totalorder %s23, 1
      %p88 = por %p86, %p87
      %p90 = scmp.ne.s32.totalorder %s75, %s89
      %p91 = scmp.eq.s32.totalorder %s23, 0
      %p92 = por %p90, %p91
      %s94 = sadd.s32 %s93, 1
      %p97 = scmp.eq.s32.totalorder %s17, 1
      %p98 = scmp.ne.s32.totalorder %s93, %s95
      %p99 = scmp.eq.s32.totalorder %s17, 0
      %p100 = por %p98, %p99
      %p101 = scmp.ne.s32.totalorder %s93, %s95
      %p102 = scmp.eq.s32.totalorder %s22, 1
      %p103 = por %p101, %p102
      %p104 = scmp.ne.s32.totalorder %s95, %s96
      %p105 = scmp.eq.s32.totalorder %s22, 0
      %p106 = por %p104, %p105
      %p107 = scmp.ne.s32.totalorder %s95, %s96
      %p108 = scmp.eq.s32.totalorder %s23, 1
      %p109 = por %p107, %p108
      %p111 = scmp.ne.s32.totalorder %s96, %s110
      %p112 = scmp.eq.s32.totalorder %s23, 0
      %p113 = por %p111, %p112
      %s115 = sadd.s32 %s114, 1
      %p118 = scmp.eq.s32.totalorder %s17, 1
      %p119 = scmp.ne.s32.totalorder %s114, %s116
      %p120 = scmp.eq.s32.totalorder %s17, 0
      %p121 = por %p119, %p120
      %p122 = scmp.ne.s32.totalorder %s114, %s116
      %p123 = scmp.eq.s32.totalorder %s22, 1
      %p124 = por %p122, %p123
      %p125 = scmp.ne.s32.totalorder %s116, %s117
      %p126 = scmp.eq.s32.totalorder %s22, 0
      %p127 = por %p125, %p126
      %p128 = scmp.ne.s32.totalorder %s116, %s117
      %p129 = scmp.eq.s32.totalorder %s23, 1
      %p130 = por %p128, %p129
      %p132 = scmp.ne.s32.totalorder %s117, %s131
      %p133 = scmp.eq.s32.totalorder %s23, 0
      %p134 = por %p132, %p133
      %s135 = ssub.s32 %s17, %s24
      %p136 = scmp.eq.s32.totalorder %s135, 0
      %s138 = sadd.s32 %s137, 1
      %s139 = scalar_select %p136, %s137, %s138
      %p142 = pneg %p136
      %p143 = scmp.eq.s32.totalorder %s17, 1
      %p144 = por %p142, %p143
      %p145 = scmp.ne.s32.totalorder %s137, %s140
      %p146 = scmp.eq.s32.totalorder %s17, 0
      %p147 = por %p145, %p146
      %p148 = scmp.ne.s32.totalorder %s137, %s140
      %p149 = scmp.eq.s32.totalorder %s22, 1
      %p150 = por %p148, %p149
      %p151 = scmp.ne.s32.totalorder %s140, %s141
      %p152 = scmp.eq.s32.totalorder %s22, 0
      %p153 = por %p151, %p152
      %p154 = scmp.ne.s32.totalorder %s140, %s141
      %p155 = scmp.eq.s32.totalorder %s23, 1
      %p156 = por %p154, %p155
      %p158 = scmp.ne.s32.totalorder %s141, %s157
      %p159 = scmp.eq.s32.totalorder %s23, 0
      %p160 = por %p158, %p159
      %p161 = scmp.le.s32.totalorder 1, %s17
      %p162 = scmp.lt.s32.totalorder %s17, 3
      %p163 = pnand %p161, %p162
      %p164 = pneg %p163
      // Predicated region
      $region9: #{tpu_custom_call.1} parent=5 // pred_check
        _
      $region10: #{tpu_custom_call.1} parent=5 // pred_check_branch
        %166 = sbr.rel (%p163) target = $region12
      $region11: #{tpu_custom_call.1} parent=5 // pred_region
        %s167 = ssub.s32 %s17, 1
        // Predicated region
        $region13: #{tpu_custom_call.1} parent=11 // pred_check
          %p168 = pneg %p64
        $region14: #{tpu_custom_call.1} parent=11 // pred_check_branch
          %170 = sbr.rel (%p168) target = $region16
        $region15: #{tpu_custom_call.1} parent=11 // pred_region
          _
        $region16: #{tpu_custom_call.1} parent=11 // pred_fallthru
          _
        // Predicated region
        $region17: #{tpu_custom_call.1} parent=11 // pred_check
          %p171 = pneg %p85
        $region18: #{tpu_custom_call.1} parent=11 // pred_check_branch
          %173 = sbr.rel (%p171) target = $region20
        $region19: #{tpu_custom_call.1} parent=11 // pred_region
          _
        $region20: #{tpu_custom_call.1} parent=11 // pred_fallthru
          _
        // Predicated region
        $region21: #{tpu_custom_call.1} parent=11 // pred_check
          %p174 = pneg %p106
        $region22: #{tpu_custom_call.1} parent=11 // pred_check_branch
          %176 = sbr.rel (%p174) target = $region24
        $region23: #{tpu_custom_call.1} parent=11 // pred_region
          _
        $region24: #{tpu_custom_call.1} parent=11 // pred_fallthru
          _
        // Predicated region
        $region25: #{tpu_custom_call.1} parent=11 // pred_check
          %p177 = pneg %p127
        $region26: #{tpu_custom_call.1} parent=11 // pred_check_branch
          %179 = sbr.rel (%p177) target = $region28
        $region27: #{tpu_custom_call.1} parent=11 // pred_region
          _
        $region28: #{tpu_custom_call.1} parent=11 // pred_fallthru
          _
      $region12: #{tpu_custom_call.1} parent=5 // pred_fallthru
        _
      %p180 = scmp.lt.s32.totalorder %s17, 2
      // Predicated region
      $region29: #{tpu_custom_call.1} parent=5 // pred_check
        %p181 = pneg %p180
      $region30: #{tpu_custom_call.1} parent=5 // pred_check_branch
        %183 = sbr.rel (%p181) target = $region32
      $region31: #{tpu_custom_call.1} parent=5 // pred_region
        // Predicated region
        $region33: #{tpu_custom_call.1} parent=31 // pred_check
          %p184 = pneg %p37
        $region34: #{tpu_custom_call.1} parent=31 // pred_check_branch
          %186 = sbr.rel (%p184) target = $region36
        $region35: #{tpu_custom_call.1} parent=31 // pred_region
          %s187 = sand.u32 %s27, 1
          %s188 = scalar_lea.sflag [#allocation3], %s187
          %s189 = sand.u32 %s27, 1
          %s190 = smul.addr %s189, 16
          %s191 = scalar_lea.vmem [#allocation2], %s190
          %s193 = ssub.s32 256, 256
          %194 = vsyncadd %s188, %s193
          %s195 = smul.addr %s17, 2
          %s196 = smul.addr %s195, 128
          %s197 = scalar_lea.hbm %s0, %s196
          %s199 = sshll.u32 %s191, 4
          %s200 = int_to_ptr.vmem [resolvable:$true] %s199
          %202 = dma.hbm_to_vmem [thread:$0]  %s197, 256, %s200, %s188
        $region36: #{tpu_custom_call.1} parent=31 // pred_fallthru
          _
      $region32: #{tpu_custom_call.1} parent=5 // pred_fallthru
        _
      %p203 = scmp.le.s32.totalorder 1, %s17
      %p204 = scmp.lt.s32.totalorder %s17, 3
      %p205 = pnand %p203, %p204
      %p206 = pneg %p205
      // Predicated region
      $region37: #{tpu_custom_call.1} parent=5 // pred_check
        _
      $region38: #{tpu_custom_call.1} parent=5 // pred_check_branch
        %208 = sbr.rel (%p205) target = $region40
      $region39: #{tpu_custom_call.1} parent=5 // pred_region
        %s209 = ssub.s32 %s17, 1
        %s210 = sand.u32 %s30, 1
        %s211 = scalar_lea.sflag [#allocation3], %s210
        %s212 = sand.u32 %s30, 1
        %s213 = smul.addr %s212, 16
        %s214 = scalar_lea.vmem [#allocation2], %s213
        // Predicated region
        $region41: #{tpu_custom_call.1} parent=39 // pred_check
          %p215 = pneg %p43
        $region42: #{tpu_custom_call.1} parent=39 // pred_check_branch
          %217 = sbr.rel (%p215) target = $region44
        $region43: #{tpu_custom_call.1} parent=39 // pred_region
          %218 = dma.done %s211, 256
        $region44: #{tpu_custom_call.1} parent=39 // pred_fallthru
          _
        %s219 = sand.u32 %s30, 1
        %s220 = scalar_lea.sflag [#allocation3], %s219
        %s221 = sand.u32 %s30, 1
        %s222 = smul.addr %s221, 16
        %s223 = scalar_lea.vmem [#allocation2], %s222
        %p224 = pneg %p43
        %p225 = pneg %p40
        %p226 = pneg %p64
        %p227 = pneg %p61
        %p228 = pneg %p85
        %p229 = pneg %p82
        %p230 = pneg %p106
        %p231 = pneg %p103
        %p232 = pneg %p127
        %p233 = pneg %p124
        %p234 = pneg %p153
        %p235 = pneg %p150
        %s236 = sand.u32 %s140, 1
        %s237 = scalar_lea.sflag [#allocation4], %s236
        %s238 = sand.u32 %s140, 1
        %s239 = smul.addr %s238, 16
        %s240 = scalar_lea.vmem [#allocation5], %s239
        %v241 = vld [vmem:[%s214] sm:$0xff]
        %v242 = vld [vmem:[%s214 + $0x8] sm:$0xff]
        %v243 = vadd.f32 %v241, %v242
        %244 = vadd.xlane.f32.xlu0 %v243
        %v245 = vpop.xlane.xlu0 %244
        %v246 = vmul.f32 %v245, 0.00390625
        %v247 = vld [vmem:[%s1] sm:$0xff]
        %v248 = vld [vmem:[%s2] sm:$0x1]
        %v250 = vlaneseq
        %v251 = vand.u32 %v250, 127
        %v252 = vlaneseq
        %v253 = vshrl.u32 %v252, 7
        %v254 = vsub.s32 %v251, %v253
        %v255 = vrot.slane %v246, %v254
        %vm256 = vcmask 64512
        %v257 = vsel %vm256, %v255, 0
        %259 = vmatprep.subr.mxu0 0.0
        %260 = vmatpush1.msra.mxu0 %v247
        %261 = vmatprep.subr.mxu0 0.0
        %262 = vmatpush1.msra.mxu0 0.0
        %263 = vmatprep.subr.mxu0 0.0
        %264 = vmatpush1.msra.mxu0 0.0
        %265 = vmatprep.subr.mxu0 0.0
        %266 = vmatpush1.msra.mxu0 0.0
        %267 = vmatprep.subr.mxu0 0.0
        %268 = vmatpush1.msra.mxu0 0.0
        %269 = vmatprep.subr.mxu0 0.0
        %270 = vmatpush1.msra.mxu0 0.0
        %271 = vmatprep.subr.mxu0 0.0
        %272 = vmatpush1.msra.mxu0 0.0
        %273 = vmatprep.subr.mxu0 0.0
        %274 = vmatpush1.msra.mxu0 0.0
        %275 = vmatprep.subr.mxu0 0.0
        %276 = vmatpush1.msra.mxu0 0.0
        %277 = vmatprep.subr.mxu0 0.0
        %278 = vmatpush1.msra.mxu0 0.0
        %279 = vmatprep.subr.mxu0 0.0
        %280 = vmatpush1.msra.mxu0 0.0
        %281 = vmatprep.subr.mxu0 0.0
        %282 = vmatpush1.msra.mxu0 0.0
        %283 = vmatprep.subr.mxu0 0.0
        %284 = vmatpush1.msra.mxu0 0.0
        %285 = vmatprep.subr.mxu0 0.0
        %286 = vmatpush1.msra.mxu0 0.0
        %287 = vmatprep.subr.mxu0 0.0
        %288 = vmatpush1.msra.mxu0 0.0
        %289 = vmatprep.subr.mxu0 0.0
        %290 = vmatpush1.msra.mxu0 0.0
        %291 = vmatprep.subr.mxu0 0.0
        %292 = vmatpush1.msra.mxu0 0.0
        %293 = vmatprep.subr.mxu0 0.0
        %294 = vmatpush1.msra.mxu0 0.0
        %295 = vmatprep.subr.mxu0 0.0
        %296 = vmatpush1.msra.mxu0 0.0
        %297 = vmatprep.subr.mxu0 0.0
        %298 = vmatpush1.msra.mxu0 0.0
        %299 = vmatprep.subr.mxu0 0.0
        %300 = vmatpush1.msra.mxu0 0.0
        %301 = vmatprep.subr.mxu0 0.0
        %302 = vmatpush1.msra.mxu0 0.0
        %303 = vmatprep.subr.mxu0 0.0
        %304 = vmatpush1.msra.mxu0 0.0
        %305 = vmatprep.subr.mxu0 0.0
        %306 = vmatpush1.msra.mxu0 0.0
        %307 = vmatprep.subr.mxu0 0.0
        %308 = vmatpush1.msra.mxu0 0.0
        %309 = vmatprep.subr.mxu0 0.0
        %310 = vmatpush1.msra.mxu0 0.0
        %311 = vmatprep.subr.mxu0 0.0
        %312 = vmatpush1.msra.mxu0 0.0
        %313 = vmatprep.subr.mxu0 0.0
        %314 = vmatpush1.msra.mxu0 0.0
        %315 = vmatprep.subr.mxu0 0.0
        %316 = vmatpush1.msra.mxu0 0.0
        %317 = vmatprep.subr.mxu0 0.0
        %318 = vmatpush1.msra.mxu0 0.0
        %319 = vmatprep.subr.mxu0 0.0
        %320 = vmatpush1.msra.mxu0 0.0
        %321 = vmatprep.subr.mxu0 0.0
        %322 = vmatpush1.msra.mxu0 0.0
        %323 = vmatprep.mubr.f32.mxu0 0.0
        %324 = vmatmul.mubr.f32.gmra.mrb[0].mxu0 %v257
        %v325 = vpop.f32.mrb[0].mxu0
        %v326 = vadd.f32 %v248, %v325
        %v327 = vpop.f32.mrb[0].mxu0
        %328 = vdwg.mxu0
        %v329 = vmax.f32 %v326, 0.0
        %v330 = vld [vmem:[%s3] sm:$0x3]
        %v331 = vld [vmem:[%s4] sm:$0x1]
        %vm332 = vcmask 15360
        %v334 = vsel %vm332, %v329, 0
        %vm336 = vcmask 1041408
        %v338 = vsel %vm336, %v330, 0
        %340 = vmatprep.subr.mxu0 0.0
        %341 = vmatpush1.msra.mxu0 %v338
        %342 = vmatprep.subr.mxu0 0.0
        %343 = vmatpush1.msra.mxu0 0.0
        %344 = vmatprep.subr.mxu0 0.0
        %345 = vmatpush1.msra.mxu0 0.0
        %346 = vmatprep.subr.mxu0 0.0
        %347 = vmatpush1.msra.mxu0 0.0
        %348 = vmatprep.subr.mxu0 0.0
        %349 = vmatpush1.msra.mxu0 0.0
        %350 = vmatprep.subr.mxu0 0.0
        %351 = vmatpush1.msra.mxu0 0.0
        %352 = vmatprep.subr.mxu0 0.0
        %353 = vmatpush1.msra.mxu0 0.0
        %354 = vmatprep.subr.mxu0 0.0
        %355 = vmatpush1.msra.mxu0 0.0
        %356 = vmatprep.subr.mxu0 0.0
        %357 = vmatpush1.msra.mxu0 0.0
        %358 = vmatprep.subr.mxu0 0.0
        %359 = vmatpush1.msra.mxu0 0.0
        %360 = vmatprep.subr.mxu0 0.0
        %361 = vmatpush1.msra.mxu0 0.0
        %362 = vmatprep.subr.mxu0 0.0
        %363 = vmatpush1.msra.mxu0 0.0
        %364 = vmatprep.subr.mxu0 0.0
        %365 = vmatpush1.msra.mxu0 0.0
        %366 = vmatprep.subr.mxu0 0.0
        %367 = vmatpush1.msra.mxu0 0.0
        %368 = vmatprep.subr.mxu0 0.0
        %369 = vmatpush1.msra.mxu0 0.0
        %370 = vmatprep.subr.mxu0 0.0
        %371 = vmatpush1.msra.mxu0 0.0
        %372 = vmatprep.subr.mxu0 0.0
        %373 = vmatpush1.msra.mxu0 0.0
        %374 = vmatprep.subr.mxu0 0.0
        %375 = vmatpush1.msra.mxu0 0.0
        %376 = vmatprep.subr.mxu0 0.0
        %377 = vmatpush1.msra.mxu0 0.0
        %378 = vmatprep.subr.mxu0 0.0
        %379 = vmatpush1.msra.mxu0 0.0
        %380 = vmatprep.subr.mxu0 0.0
        %381 = vmatpush1.msra.mxu0 0.0
        %382 = vmatprep.subr.mxu0 0.0
        %383 = vmatpush1.msra.mxu0 0.0
        %384 = vmatprep.subr.mxu0 0.0
        %385 = vmatpush1.msra.mxu0 0.0
        %386 = vmatprep.subr.mxu0 0.0
        %387 = vmatpush1.msra.mxu0 0.0
        %388 = vmatprep.subr.mxu0 0.0
        %389 = vmatpush1.msra.mxu0 0.0
        %390 = vmatprep.subr.mxu0 0.0
        %391 = vmatpush1.msra.mxu0 0.0
        %392 = vmatprep.subr.mxu0 0.0
        %393 = vmatpush1.msra.mxu0 0.0
        %394 = vmatprep.subr.mxu0 0.0
        %395 = vmatpush1.msra.mxu0 0.0
        %396 = vmatprep.subr.mxu0 0.0
        %397 = vmatpush1.msra.mxu0 0.0
        %398 = vmatprep.subr.mxu0 0.0
        %399 = vmatpush1.msra.mxu0 0.0
        %400 = vmatprep.subr.mxu0 0.0
        %401 = vmatpush1.msra.mxu0 0.0
        %402 = vmatprep.subr.mxu0 0.0
        %403 = vmatpush1.msra.mxu0 0.0
        %404 = vmatprep.mubr.f32.mxu0 0.0
        %405 = vmatmul.mubr.f32.gmra.mrb[0].mxu0 %v334
        %v406 = vpop.f32.mrb[0].mxu0
        %v407 = vadd.f32 %v331, %v406
        %v408 = vpop.f32.mrb[0].mxu0
        %409 = vdwg.mxu0
        %v410 = vxor.u32 %v407, 2147483648
        %v411 = vmul.f32 %v410, 1.442695
        %v412 = vpow.pop %v411
        %v413 = vadd.f32 %v412, 1.0
        %v414 = vrcp.pop %v413
        %v415 = vmul.f32 1.0, %v414
        %v416 = vlaneseq
        %v417 = vshrl.u32 %v416, 7
        %v418 = vsub.s32 0, %v417
        %v419 = vrot.slane %v415, %v418
        %421 = vbcast.lane.b32.xlu0 %v419, 256
        %v422 = vpop.permute.xlu0 %421
        %v423 = vmul.f32 %v241, %v422
        %v424 = vmul.f32 %v242, %v422
        %425 = vst [vmem:[%s240] sm:$0xff] %v423
        %426 = vst [vmem:[%s240 + $0x8] sm:$0xff] %v424
        %s427 = sand.u32 %s140, 1
        %s428 = scalar_lea.sflag [#allocation4], %s427
        %s429 = sand.u32 %s140, 1
        %s430 = smul.addr %s429, 16
        %s431 = scalar_lea.vmem [#allocation5], %s430
        // Predicated region
        $region45: #{tpu_custom_call.1} parent=39 // pred_check
          %p432 = pneg %p150
        $region46: #{tpu_custom_call.1} parent=39 // pred_check_branch
          %434 = sbr.rel (%p432) target = $region48
        $region47: #{tpu_custom_call.1} parent=39 // pred_region
          %s436 = ssub.s32 256, 256
          %437 = vsyncadd %s428, %s436
          %s438 = smul.addr %s22, 2
          %s439 = smul.addr %s438, 128
          %s440 = scalar_lea.hbm %s5, %s439
          %s442 = sshll.u32 %s431, 4
          %s443 = int_to_ptr.vmem [resolvable:$true] %s442
          %445 = dma.vmem_to_hbm [thread:$0]  %s443, 256, %s440, %s428
        $region48: #{tpu_custom_call.1} parent=39 // pred_fallthru
          _
      $region40: #{tpu_custom_call.1} parent=5 // pred_fallthru
        _
      %p446 = scmp.le.s32.totalorder 2, %s17
      // Predicated region
      $region49: #{tpu_custom_call.1} parent=5 // pred_check
        %p447 = pneg %p446
      $region50: #{tpu_custom_call.1} parent=5 // pred_check_branch
        %449 = sbr.rel (%p447) target = $region52
      $region51: #{tpu_custom_call.1} parent=5 // pred_region
        %s450 = ssub.s32 %s17, 2
        // Predicated region
        $region53: #{tpu_custom_call.1} parent=51 // pred_check
          %p451 = pneg %p156
        $region54: #{tpu_custom_call.1} parent=51 // pred_check_branch
          %453 = sbr.rel (%p451) target = $region56
        $region55: #{tpu_custom_call.1} parent=51 // pred_region
          %s454 = sand.u32 %s141, 1
          %s455 = scalar_lea.sflag [#allocation4], %s454
          %s456 = sand.u32 %s141, 1
          %s457 = smul.addr %s456, 16
          %s458 = scalar_lea.vmem [#allocation5], %s457
          %459 = dma.done %s455, 256
        $region56: #{tpu_custom_call.1} parent=51 // pred_fallthru
          _
      $region52: #{tpu_custom_call.1} parent=5 // pred_fallthru
        _
    $region6: #{tpu_custom_call.1} parent=1 // loop_footer
      %s21 = sadd.s32 1, %s17
    $region7: #{tpu_custom_call.1} parent=1 // loop_footer_branch
      %16 = sbr.rel target = $region3
    $region8: #{tpu_custom_call.1} parent=1 // loop_exit
      _
    %460 = vsyncpa [#allocation3], 1
    %s461 = scalar_lea.sflag [#allocation3], 1
    %462 = vsyncpa %s461, 1
    %463 = vsyncpa [#allocation4], 1
    %s464 = scalar_lea.sflag [#allocation4], 1
    %465 = vsyncpa %s464, 1

</llo_original>
